<compile_context>
chip_gen: v6e
topology: v6e:2x2x1
jax: 0.10.0
libtpu: 0.0.40
codegen_flags: <defaults>
</compile_context>

<pallas_src>
import jax
import jax.numpy as jnp
from jax import lax
from jax.experimental import pallas as pl
from jax.experimental.pallas import tpu as pltpu


def _round_up(x, m):
    return (x + m - 1) // m * m


def make_sentiment_cnn_kernel(filter_sizes, num_filters, seq_len, seq_ext, v_pad):
    filter_sizes = tuple(filter_sizes)
    F = num_filters
    n_fs = len(filter_sizes)
    max_fs = max(filter_sizes)
    GS = n_fs * F            # lanes per tap group (tap-major layout)
    CF = n_fs * F            # width of the pooled/concat vector

    def kernel(tok_ref, tw_ref, mask_ref, fcw_ref, fcb_ref, out_ref):
        nt = tok_ref.shape[0]              # TB * seq_ext
        tb = nt // seq_ext
        c_pad = tw_ref.shape[1]

        # ---- fused embedding gather + all conv taps: ONE bf16 MXU matmul ----
        # one_hot(token) @ (embedding @ conv_taps); padded time rows use
        # token = -1 -> all-zero one-hot row -> zero activation row.
        # TODO(synk): for large vocabularies replace the one-hot matmul with an
        # in-kernel row gather (jnp.take on a VMEM table) or a DMA row gather.
        tok = tok_ref[...]                                            # (nt, 1) int32
        iota_v = lax.broadcasted_iota(jnp.int32, (nt, v_pad), 1)
        one_hot = jnp.where(tok == iota_v, 1.0, 0.0).astype(jnp.bfloat16)
        y = jnp.dot(one_hot, tw_ref[...],
                    preferred_element_type=jnp.float32)               # (nt, c_pad) f32
        y = y.reshape(tb, seq_ext, c_pad)                             # sublane-aligned split

        # ---- "valid" conv = shift-add of tap-major lane slabs (wide vregs) ----
        # Conv bias is pre-folded into the tap-0 columns of tw.
        z = y[:, 0:seq_len, 0:CF]
        for i in range(1, max_fs):
            z = z + y[:, i:i + seq_len, i * GS:i * GS + CF]
        z = jnp.maximum(z, 0.0)                 # ReLU
        z = z * mask_ref[...]                   # zero partial windows (exact post-ReLU)
        pooled = jnp.max(z, axis=1)             # (tb, CF) max over time

        # ---- single fused FC (pooled lanes are already the concat order) ----
        out = jnp.dot(pooled, fcw_ref[...], preferred_element_type=jnp.float32)
        out = out + fcb_ref[...]
        # TODO(synk): nn.Dropout(0.5) is the identity in eval/inference mode; not applied.
        out_ref[...] = out.astype(out_ref.dtype)

    return kernel


def prepare_params(params, filter_sizes, num_filters, output_dim,
                   compute_dtype=jnp.bfloat16):
    """Fold embedding into tap-major conv weights; pad to lane-dense layouts (host-side)."""
    filter_sizes = tuple(filter_sizes)
    F = num_filters
    n_fs = len(filter_sizes)
    max_fs = max(filter_sizes)
    V, E = params["embedding"].shape
    GS = n_fs * F
    CF = n_fs * F
    V_pad = _round_up(V, 128)                     # matmul K dim (one-hot lanes)
    C_pad = _round_up(max_fs * GS, 128)           # fused tap-major channels
    O_pad = _round_up(output_dim, 128)            # fc output lanes (unmasked vst)

    table = params["embedding"].astype(jnp.float32)                  # (V, E)
    tw = jnp.zeros((V_pad, C_pad), jnp.float32)
    for k, fs in enumerate(filter_sizes):
        for i in range(fs):
            col = i * GS + k * F
            tap = table @ params["conv_w"][k][i]                     # (V, F)
            if i == 0:
                tap = tap + params["conv_b"][k]                      # fold conv bias into tap 0
            tw = tw.at[:V, col:col + F].set(tap)
    tw = tw.astype(compute_dtype)

    fc_w = jnp.zeros((CF, O_pad), jnp.float32).at[:, :output_dim].set(params["fc_w"])
    fc_b = jnp.zeros((1, O_pad), jnp.float32).at[:, :output_dim].set(params["fc_b"])

    return dict(tw=tw, fc_w=fc_w, fc_b=fc_b,
                V_pad=V_pad, C_pad=C_pad, O_pad=O_pad, CF=CF)


def sentiment_cnn_forward(tokens, params, filter_sizes, num_filters, output_dim,
                          batch_tile=None):
    filter_sizes = tuple(filter_sizes)
    F = num_filters
    max_fs = max(filter_sizes)
    B, S = tokens.shape
    assert S >= max_fs, "sequence length must be >= the largest conv filter size"

    prep = prepare_params(params, filter_sizes, num_filters, output_dim)
    V_pad, C_pad, O_pad, CF = prep["V_pad"], prep["C_pad"], prep["O_pad"], prep["CF"]

    # Time padded so every tap shift stays in range and the in-kernel reshape
    # (TB*S_ext, C) -> (TB, S_ext, C) is sublane aligned.
    S_ext = _round_up(S + max_fs - 1, 8)

    # ---- generation-aware VMEM limit & batch-tile sizing ----
    try:
        info = pltpu.get_tpu_info()
        vmem_cap = int(getattr(info, "vmem_capacity_bytes", 64 * 1024 * 1024))
    except Exception:
        vmem_cap = 64 * 1024 * 1024
    # ~48 MiB on v7x (64 MiB physical), ~96 MiB on v5e/v6e (128 MiB physical).
    vmem_limit = int(min(vmem_cap * 3 // 4, 100 * 1024 * 1024))

    # Rough live VMEM per batch row: one_hot + y intermediates + token/out double buffers.
    bytes_per_row = (S_ext * (V_pad * 2 + C_pad * 4 + 2 * 4)
                     + S * CF * 4 + 2 * O_pad * 4)
    tb_cap = (vmem_limit // 2) // max(bytes_per_row, 1)
    tb_cap = max(16, min(1024, tb_cap // 16 * 16))

    if batch_tile is None:
        # Largest tile that fits, but keep >= 2 grid steps for v7x's two TensorCores.
        TB = min(tb_cap, max(16, _round_up((B + 1) // 2, 16)))
    else:
        TB = min(tb_cap, max(16, _round_up(batch_tile, 16)))
    B_pad = _round_up(B, TB)
    if B_pad // TB < 2:
        B_pad = 2 * TB                      # second tile so the second TC gets work
    grid = (B_pad // TB,)

    # ---- tokens: pad batch, pad time with sentinel -1 (-> zero one-hot row) ----
    tok = tokens.astype(jnp.int32)
    tok = jnp.pad(tok, ((0, B_pad - B), (0, 0)))
    tok = jnp.pad(tok, ((0, 0), (0, S_ext - S)), constant_values=-1)
    tok_col = tok.reshape(B_pad * S_ext, 1)

    # Valid-window mask per (time, filter); applied after ReLU so 0 is exact.
    mask = jnp.zeros((S, CF), jnp.float32)
    for k, fs in enumerate(filter_sizes):
        valid = (jnp.arange(S) <= (S - fs)).astype(jnp.float32)[:, None]   # (S, 1)
        mask = mask.at[:, k * F:(k + 1) * F].set(jnp.broadcast_to(valid, (S, F)))

    kernel = make_sentiment_cnn_kernel(filter_sizes, num_filters, S, S_ext, V_pad)

    flops = grid[0] * (2 * TB * S_ext * V_pad * C_pad + 2 * TB * CF * O_pad)
    bytes_accessed = (B_pad * S_ext * 4 + B_pad * O_pad * 4
                      + V_pad * C_pad * 2 + CF * O_pad * 4 + S * CF * 4)

    out = pl.pallas_call(
        kernel,
        out_shape=jax.ShapeDtypeStruct((B_pad, O_pad), jnp.float32),
        grid=grid,
        in_specs=[
            pl.BlockSpec((TB * S_ext, 1), lambda i: (i, 0)),     # tokens (column vector)
            pl.BlockSpec((V_pad, C_pad), lambda i: (0, 0)),      # fused emb@conv taps (bf16)
            pl.BlockSpec((S, CF), lambda i: (0, 0)),             # valid-window mask
            pl.BlockSpec((CF, O_pad), lambda i: (0, 0)),         # fc weight
            pl.BlockSpec((1, O_pad), lambda i: (0, 0)),          # fc bias
        ],
        out_specs=pl.BlockSpec((TB, O_pad), lambda i: (i, 0)),   # lane-dense store
        compiler_params=pltpu.CompilerParams(
            dimension_semantics=("parallel",),                   # batch tiles -> both TCs
            vmem_limit_bytes=vmem_limit,
        ),
        cost_estimate=pl.CostEstimate(flops=flops, transcendentals=0,
                                      bytes_accessed=bytes_accessed),
    )(tok_col, prep["tw"], mask, prep["fc_w"], prep["fc_b"])

    return out[:B, :output_dim]


def reference_forward(tokens, params, filter_sizes, num_filters):
    # Pure-JAX f32 reference matching the PyTorch forward (eval mode).
    emb = jnp.take(params["embedding"], tokens, axis=0).astype(jnp.float32)
    B, S, E = emb.shape
    pooled = []
    for k, fs in enumerate(filter_sizes):
        w = params["conv_w"][k]
        b = params["conv_b"][k]
        L = S - fs + 1
        conv = jnp.zeros((B, L, num_filters), jnp.float32)
        for i in range(fs):
            conv = conv + jnp.einsum("ble,ef->blf", emb[:, i:i + L, :], w[i])
        conv = jax.nn.relu(conv + b)
        pooled.append(jnp.max(conv, axis=1))
    cat = jnp.concatenate(pooled, axis=1)
    return cat @ params["fc_w"] + params["fc_b"]


def init_params(key, vocab_size, embedding_dim, num_filters, filter_sizes, output_dim):
    n_fs = len(filter_sizes)
    keys = jax.random.split(key, 2 * n_fs + 3)
    params = {
        "embedding": 0.1 * jax.random.normal(keys[0], (vocab_size, embedding_dim), jnp.float32),
        "conv_w": [],
        "conv_b": [],
    }
    for k, fs in enumerate(filter_sizes):
        params["conv_w"].append(
            0.1 * jax.random.normal(keys[1 + k], (fs, embedding_dim, num_filters), jnp.float32))
        params["conv_b"].append(
            0.01 * jax.random.normal(keys[1 + n_fs + k], (1, num_filters), jnp.float32))
    params["fc_w"] = 0.1 * jax.random.normal(
        keys[1 + 2 * n_fs], (n_fs * num_filters, output_dim), jnp.float32)
    params["fc_b"] = 0.01 * jax.random.normal(
        keys[2 + 2 * n_fs], (1, output_dim), jnp.float32)
    return params


if __name__ == "__main__":
    vocab_size = 50
    embedding_dim = 32
    num_filters = 8
    filter_sizes = (2, 3, 4)
    output_dim = 2
    B, S = 16, 8

    root = jax.random.PRNGKey(0)
    k_params, k_tok = jax.random.split(root)
    params = init_params(k_params, vocab_size, embedding_dim, num_filters,
                         filter_sizes, output_dim)
    tokens = jax.random.randint(k_tok, (B, S), 0, vocab_size, dtype=jnp.int32)

    out = sentiment_cnn_forward(tokens, params, filter_sizes, num_filters, output_dim)
    out = jax.block_until_ready(out)

    ref = reference_forward(tokens, params, filter_sizes, num_filters)
    assert out.shape == (B, output_dim)
    # bf16 fused weights (f32 accumulation) -> looser tolerance than pure f32.
    assert jnp.allclose(out, ref, rtol=2e-2, atol=1e-2), (out, ref)

    print("KERNEL_OK")
</pallas_src>

<mosaic_0001>
module attributes {stable_mosaic.version = 11 : i64} {
  func.func @kernel(%arg0: i32, %arg1: memref<256x1xi32, #tpu.memory_space<vmem>>, %arg2: memref<128x128xbf16, #tpu.memory_space<vmem>>, %arg3: memref<8x24xf32, #tpu.memory_space<vmem>>, %arg4: memref<24x128xf32, #tpu.memory_space<vmem>>, %arg5: memref<1x128xf32, #tpu.memory_space<vmem>>, %arg6: memref<16x128xf32, #tpu.memory_space<vmem>>) attributes {dimension_semantics = [#tpu.dimension_semantics<parallel>], iteration_bounds = array<i64: 2>, scalar_prefetch = 0 : i64, scratch_operands = 0 : i64, tpu.core_type = #tpu.core_type<tc>, window_params = [{transform_indices = @transform_0, window_bounds = array<i64: 256, 1>}, {pipeline_mode = #tpu.pipeline_mode<synchronous>, transform_indices = @transform_1, window_bounds = array<i64: 128, 128>}, {pipeline_mode = #tpu.pipeline_mode<synchronous>, transform_indices = @transform_2, window_bounds = array<i64: 8, 24>}, {pipeline_mode = #tpu.pipeline_mode<synchronous>, transform_indices = @transform_3, window_bounds = array<i64: 24, 128>}, {pipeline_mode = #tpu.pipeline_mode<synchronous>, transform_indices = @transform_4, window_bounds = array<i64: 1, 128>}, {transform_indices = @transform_5, window_bounds = array<i64: 16, 128>}]} {
    %c0 = arith.constant 0 : index
    %c0_0 = arith.constant 0 : index
    %0 = vector.load %arg1[%c0, %c0_0] : memref<256x1xi32, #tpu.memory_space<vmem>>, vector<256x1xi32>
    %1 = tpu.iota {dimensions = array<i32: 1>} : vector<256x128xi32>
    %2 = vector.broadcast %0 : vector<256x1xi32> to vector<256x128xi32>
    %3 = arith.cmpi eq, %2, %1 : vector<256x128xi32>
    %cst = arith.constant 1.000000e+00 : f32
    %cst_1 = arith.constant 0.000000e+00 : f32
    %4 = vector.broadcast %cst : f32 to vector<256x128xf32>
    %5 = vector.broadcast %cst_1 : f32 to vector<256x128xf32>
    %6 = arith.select %3, %4, %5 : vector<256x128xi1>, vector<256x128xf32>
    %7 = arith.truncf %6 : vector<256x128xf32> to vector<256x128xbf16>
    %c0_2 = arith.constant 0 : index
    %c0_3 = arith.constant 0 : index
    %8 = vector.load %arg2[%c0_2, %c0_3] : memref<128x128xbf16, #tpu.memory_space<vmem>>, vector<128x128xbf16>
    %cst_4 = arith.constant dense<0.000000e+00> : vector<256x128xf32>
    %9 = tpu.matmul %7, %8, %cst_4 {dimension_numbers = #tpu.dot_dimension_numbers<[1], [0], [0], [1], [0, 0, 1, 1], [], []>} : vector<256x128xbf16>, vector<128x128xbf16>, vector<256x128xf32> -> vector<256x128xf32>
    %10 = vector.shape_cast %9 : vector<256x128xf32> to vector<16x16x128xf32>
    %11 = vector.extract_strided_slice %10 {offsets = [0, 0, 0], sizes = [16, 8, 24], strides = [1, 1, 1]} : vector<16x16x128xf32> to vector<16x8x24xf32>
    %12 = vector.extract_strided_slice %10 {offsets = [0, 1, 24], sizes = [16, 8, 24], strides = [1, 1, 1]} : vector<16x16x128xf32> to vector<16x8x24xf32>
    %13 = arith.addf %11, %12 : vector<16x8x24xf32>
    %14 = vector.extract_strided_slice %10 {offsets = [0, 2, 48], sizes = [16, 8, 24], strides = [1, 1, 1]} : vector<16x16x128xf32> to vector<16x8x24xf32>
    %15 = arith.addf %13, %14 : vector<16x8x24xf32>
    %16 = vector.extract_strided_slice %10 {offsets = [0, 3, 72], sizes = [16, 8, 24], strides = [1, 1, 1]} : vector<16x16x128xf32> to vector<16x8x24xf32>
    %17 = arith.addf %15, %16 : vector<16x8x24xf32>
    %cst_5 = arith.constant 0.000000e+00 : f32
    %18 = vector.broadcast %cst_5 : f32 to vector<16x8x24xf32>
    %19 = arith.maximumf %17, %18 : vector<16x8x24xf32>
    %c0_6 = arith.constant 0 : index
    %c0_7 = arith.constant 0 : index
    %20 = vector.load %arg3[%c0_6, %c0_7] : memref<8x24xf32, #tpu.memory_space<vmem>>, vector<8x24xf32>
    %21 = vector.shape_cast %20 : vector<8x24xf32> to vector<1x8x24xf32>
    %22 = vector.broadcast %21 : vector<1x8x24xf32> to vector<16x8x24xf32>
    %23 = arith.mulf %19, %22 : vector<16x8x24xf32>
    %cst_8 = arith.constant dense<0xFF800000> : vector<16x24xf32>
    %24 = vector.multi_reduction <maximumf>, %23, %cst_8 [1] : vector<16x8x24xf32> to vector<16x24xf32>
    %c0_9 = arith.constant 0 : index
    %c0_10 = arith.constant 0 : index
    %25 = vector.load %arg4[%c0_9, %c0_10] : memref<24x128xf32, #tpu.memory_space<vmem>>, vector<24x128xf32>
    %cst_11 = arith.constant dense<0.000000e+00> : vector<16x128xf32>
    %26 = tpu.matmul %24, %25, %cst_11 {dimension_numbers = #tpu.dot_dimension_numbers<[1], [0], [0], [1], [0, 0, 1, 1], [], []>} : vector<16x24xf32>, vector<24x128xf32>, vector<16x128xf32> -> vector<16x128xf32>
    %c0_12 = arith.constant 0 : index
    %c0_13 = arith.constant 0 : index
    %27 = vector.load %arg5[%c0_12, %c0_13] : memref<1x128xf32, #tpu.memory_space<vmem>>, vector<1x128xf32>
    %28 = vector.broadcast %27 : vector<1x128xf32> to vector<16x128xf32>
    %29 = arith.addf %26, %28 : vector<16x128xf32>
    %c0_14 = arith.constant 0 : index
    %c0_15 = arith.constant 0 : index
    %30 = vector.load %arg6[%c0_14, %c0_15] : memref<16x128xf32, #tpu.memory_space<vmem>>, vector<16x128xf32>
    tpu.vector_store %arg6[%c0_14, %c0_15], %29 {strides = array<i32>} : memref<16x128xf32, #tpu.memory_space<vmem>>, vector<16x128xf32>,
    return
  }
  func.func @transform_0(%arg0: i32) -> (i32, i32) {
    %c0_i32 = arith.constant 0 : i32
    %c0_i32_0 = arith.constant 0 : i32
    return %arg0, %c0_i32 : i32, i32
  }
  func.func @transform_1(%arg0: i32) -> (i32, i32) {
    %c0_i32 = arith.constant 0 : i32
    %c0_i32_0 = arith.constant 0 : i32
    %c0_i32_1 = arith.constant 0 : i32
    return %c0_i32, %c0_i32_0 : i32, i32
  }
  func.func @transform_2(%arg0: i32) -> (i32, i32) {
    %c0_i32 = arith.constant 0 : i32
    %c0_i32_0 = arith.constant 0 : i32
    %c0_i32_1 = arith.constant 0 : i32
    return %c0_i32, %c0_i32_0 : i32, i32
  }
  func.func @transform_3(%arg0: i32) -> (i32, i32) {
    %c0_i32 = arith.constant 0 : i32
    %c0_i32_0 = arith.constant 0 : i32
    %c0_i32_1 = arith.constant 0 : i32
    return %c0_i32, %c0_i32_0 : i32, i32
  }
  func.func @transform_4(%arg0: i32) -> (i32, i32) {
    %c0_i32 = arith.constant 0 : i32
    %c0_i32_0 = arith.constant 0 : i32
    %c0_i32_1 = arith.constant 0 : i32
    return %c0_i32, %c0_i32_0 : i32, i32
  }
  func.func @transform_5(%arg0: i32) -> (i32, i32) {
    %c0_i32 = arith.constant 0 : i32
    %c0_i32_0 = arith.constant 0 : i32
    return %arg0, %c0_i32 : i32, i32
  }
}

</mosaic_0001>

<llo_original>
// kernel: tpu_custom_call.1
$region0: #{tpu_custom_call.1}
  #allocation0 [shape = 'u32[]', space=smem, size = 0x4, offset = 0x4, fixed_abs, tag = 'smem constant byte address 0x4 - core index']
  #allocation1 [shape = 'u32[144,128]{1,0:T(1,128)}', space=vmem, size = 0x12000, scoped, tag = 'internal scratch']
  %s0 = inlined_call_operand.vmem [shape: s32[512,1], index: 0, kind: input, shape index: {}]
  %s1 = inlined_call_operand.vmem [shape: bf16[128,128], index: 1, kind: input, shape index: {}]
  %s2 = inlined_call_operand.vmem [shape: f32[8,24], index: 2, kind: input, shape index: {}]
  %s3 = inlined_call_operand.vmem [shape: f32[24,128], index: 3, kind: input, shape index: {}]
  %s4 = inlined_call_operand.vmem [shape: f32[1,128], index: 4, kind: input, shape index: {}]
  %s5 = inlined_call_operand.hbm [shape: f32[32,128], index: 5, kind: output, shape index: {}]
  %s6 = sld [smem:[#allocation0]]
  $region53: #{tpu_custom_call.1} parent=0
    _
  %s8 = ssub.s32 1, %s6
  %s9 = scalar_select 0, %s8, %s6
  $region1: #{tpu_custom_call.1} parent=0
    #allocation2 [shape = 'u8[16384]{0}', space=vmem, size = 0x4000, scoped, tag = 'output window, operand 0']
    #allocation3 [shape = 's32[2]{0}', space=sflag, size = 0x8, scoped, tag = 'scoped memory for tpu_custom_call.1']
    %10 = vsyncpa [#allocation3], 0
    %s11 = scalar_lea.sflag [#allocation3], 1
    %12 = vsyncpa %s11, 0
    loop: start=0, step=1, limit=4
    $region2: #{tpu_custom_call.1} parent=1 // loop_pre_header
      _
    $region3: #{tpu_custom_call.1} parent=1 // loop_header
      %s14 = sphi 0, %s18
      %p15 = scmp.ge.s32.totalorder %s14, 4
      %s24 = sphi 0, %s26
      %s27 = sphi 0, %s24
      %s28 = sphi 0, %s27
      %s44 = sphi 0, %s28
      %s48 = sphi 0, %s48
      %s50 = sphi 0, %s48
      %s51 = sphi 0, %s50
      %s65 = sphi 0, %s51
      %s69 = sphi 0, %s69
      %s71 = sphi 0, %s69
      %s72 = sphi 0, %s71
      %s86 = sphi 0, %s72
      %s90 = sphi 0, %s90
      %s92 = sphi 0, %s90
      %s93 = sphi 0, %s92
      %s107 = sphi 0, %s93
      %s111 = sphi 0, %s111
      %s113 = sphi 0, %s111
      %s114 = sphi 0, %s113
      %s128 = sphi 0, %s114
      %s134 = sphi 0, %s136
      %s137 = sphi 0, %s134
      %s138 = sphi 0, %s137
      %s154 = sphi 0, %s138
    $region4: #{tpu_custom_call.1} parent=1 // loop_header_branch
      %17 = sbr.rel (%p15) target = $region8
    $region5: #{tpu_custom_call.1} parent=1 // loop_body
      %s19 = ssub.s32 %s14, 1
      %s20 = ssub.s32 %s14, 2
      %s21 = sadd.s32 %s14, 1
      %s22 = ssub.s32 %s14, %s21
      %p23 = scmp.eq.s32.totalorder %s22, 0
      %s25 = sadd.s32 %s24, 1
      %s26 = scalar_select %p23, %s24, %s25
      %p29 = pneg %p23
      %p30 = scmp.eq.s32.totalorder %s14, 1
      %p31 = por %p29, %p30
      %p32 = scmp.ne.s32.totalorder %s24, %s27
      %p33 = scmp.eq.s32.totalorder %s14, 0
      %p34 = por %p32, %p33
      %p35 = scmp.ne.s32.totalorder %s24, %s27
      %p36 = scmp.eq.s32.totalorder %s19, 1
      %p37 = por %p35, %p36
      %p38 = scmp.ne.s32.totalorder %s27, %s28
      %p39 = scmp.eq.s32.totalorder %s19, 0
      %p40 = por %p38, %p39
      %p41 = scmp.ne.s32.totalorder %s27, %s28
      %p42 = scmp.eq.s32.totalorder %s20, 1
      %p43 = por %p41, %p42
      %p45 = scmp.ne.s32.totalorder %s28, %s44
      %p46 = scmp.eq.s32.totalorder %s20, 0
      %p47 = por %p45, %p46
      %s49 = sadd.s32 %s48, 1
      %p52 = scmp.eq.s32.totalorder %s14, 1
      %p53 = scmp.ne.s32.totalorder %s48, %s50
      %p54 = scmp.eq.s32.totalorder %s14, 0
      %p55 = por %p53, %p54
      %p56 = scmp.ne.s32.totalorder %s48, %s50
      %p57 = scmp.eq.s32.totalorder %s19, 1
      %p58 = por %p56, %p57
      %p59 = scmp.ne.s32.totalorder %s50, %s51
      %p60 = scmp.eq.s32.totalorder %s19, 0
      %p61 = por %p59, %p60
      %p62 = scmp.ne.s32.totalorder %s50, %s51
      %p63 = scmp.eq.s32.totalorder %s20, 1
      %p64 = por %p62, %p63
      %p66 = scmp.ne.s32.totalorder %s51, %s65
      %p67 = scmp.eq.s32.totalorder %s20, 0
      %p68 = por %p66, %p67
      %s70 = sadd.s32 %s69, 1
      %p73 = scmp.eq.s32.totalorder %s14, 1
      %p74 = scmp.ne.s32.totalorder %s69, %s71
      %p75 = scmp.eq.s32.totalorder %s14, 0
      %p76 = por %p74, %p75
      %p77 = scmp.ne.s32.totalorder %s69, %s71
      %p78 = scmp.eq.s32.totalorder %s19, 1
      %p79 = por %p77, %p78
      %p80 = scmp.ne.s32.totalorder %s71, %s72
      %p81 = scmp.eq.s32.totalorder %s19, 0
      %p82 = por %p80, %p81
      %p83 = scmp.ne.s32.totalorder %s71, %s72
      %p84 = scmp.eq.s32.totalorder %s20, 1
      %p85 = por %p83, %p84
      %p87 = scmp.ne.s32.totalorder %s72, %s86
      %p88 = scmp.eq.s32.totalorder %s20, 0
      %p89 = por %p87, %p88
      %s91 = sadd.s32 %s90, 1
      %p94 = scmp.eq.s32.totalorder %s14, 1
      %p95 = scmp.ne.s32.totalorder %s90, %s92
      %p96 = scmp.eq.s32.totalorder %s14, 0
      %p97 = por %p95, %p96
      %p98 = scmp.ne.s32.totalorder %s90, %s92
      %p99 = scmp.eq.s32.totalorder %s19, 1
      %p100 = por %p98, %p99
      %p101 = scmp.ne.s32.totalorder %s92, %s93
      %p102 = scmp.eq.s32.totalorder %s19, 0
      %p103 = por %p101, %p102
      %p104 = scmp.ne.s32.totalorder %s92, %s93
      %p105 = scmp.eq.s32.totalorder %s20, 1
      %p106 = por %p104, %p105
      %p108 = scmp.ne.s32.totalorder %s93, %s107
      %p109 = scmp.eq.s32.totalorder %s20, 0
      %p110 = por %p108, %p109
      %s112 = sadd.s32 %s111, 1
      %p115 = scmp.eq.s32.totalorder %s14, 1
      %p116 = scmp.ne.s32.totalorder %s111, %s113
      %p117 = scmp.eq.s32.totalorder %s14, 0
      %p118 = por %p116, %p117
      %p119 = scmp.ne.s32.totalorder %s111, %s113
      %p120 = scmp.eq.s32.totalorder %s19, 1
      %p121 = por %p119, %p120
      %p122 = scmp.ne.s32.totalorder %s113, %s114
      %p123 = scmp.eq.s32.totalorder %s19, 0
      %p124 = por %p122, %p123
      %p125 = scmp.ne.s32.totalorder %s113, %s114
      %p126 = scmp.eq.s32.totalorder %s20, 1
      %p127 = por %p125, %p126
      %p129 = scmp.ne.s32.totalorder %s114, %s128
      %p130 = scmp.eq.s32.totalorder %s20, 0
      %p131 = por %p129, %p130
      %s132 = ssub.s32 %s14, %s21
      %p133 = scmp.eq.s32.totalorder %s132, 0
      %s135 = sadd.s32 %s134, 1
      %s136 = scalar_select %p133, %s134, %s135
      %p139 = pneg %p133
      %p140 = scmp.eq.s32.totalorder %s14, 1
      %p141 = por %p139, %p140
      %p142 = scmp.ne.s32.totalorder %s134, %s137
      %p143 = scmp.eq.s32.totalorder %s14, 0
      %p144 = por %p142, %p143
      %p145 = scmp.ne.s32.totalorder %s134, %s137
      %p146 = scmp.eq.s32.totalorder %s19, 1
      %p147 = por %p145, %p146
      %p148 = scmp.ne.s32.totalorder %s137, %s138
      %p149 = scmp.eq.s32.totalorder %s19, 0
      %p150 = por %p148, %p149
      %p151 = scmp.ne.s32.totalorder %s137, %s138
      %p152 = scmp.eq.s32.totalorder %s20, 1
      %p153 = por %p151, %p152
      %p155 = scmp.ne.s32.totalorder %s138, %s154
      %p156 = scmp.eq.s32.totalorder %s20, 0
      %p157 = por %p155, %p156
      %p158 = scmp.le.s32.totalorder 1, %s14
      %p159 = scmp.lt.s32.totalorder %s14, 3
      %p160 = pnand %p158, %p159
      %p161 = pneg %p160
      // Predicated region
      $region9: #{tpu_custom_call.1} parent=5 // pred_check
        _
      $region10: #{tpu_custom_call.1} parent=5 // pred_check_branch
        %163 = sbr.rel (%p160) target = $region12
      $region11: #{tpu_custom_call.1} parent=5 // pred_region
        %s164 = ssub.s32 %s14, 1
        // Predicated region
        $region13: #{tpu_custom_call.1} parent=11 // pred_check
          %p165 = pneg %p61
        $region14: #{tpu_custom_call.1} parent=11 // pred_check_branch
          %167 = sbr.rel (%p165) target = $region16
        $region15: #{tpu_custom_call.1} parent=11 // pred_region
          _
        $region16: #{tpu_custom_call.1} parent=11 // pred_fallthru
          _
        // Predicated region
        $region17: #{tpu_custom_call.1} parent=11 // pred_check
          %p168 = pneg %p82
        $region18: #{tpu_custom_call.1} parent=11 // pred_check_branch
          %170 = sbr.rel (%p168) target = $region20
        $region19: #{tpu_custom_call.1} parent=11 // pred_region
          _
        $region20: #{tpu_custom_call.1} parent=11 // pred_fallthru
          _
        // Predicated region
        $region21: #{tpu_custom_call.1} parent=11 // pred_check
          %p171 = pneg %p103
        $region22: #{tpu_custom_call.1} parent=11 // pred_check_branch
          %173 = sbr.rel (%p171) target = $region24
        $region23: #{tpu_custom_call.1} parent=11 // pred_region
          _
        $region24: #{tpu_custom_call.1} parent=11 // pred_fallthru
          _
        // Predicated region
        $region25: #{tpu_custom_call.1} parent=11 // pred_check
          %p174 = pneg %p124
        $region26: #{tpu_custom_call.1} parent=11 // pred_check_branch
          %176 = sbr.rel (%p174) target = $region28
        $region27: #{tpu_custom_call.1} parent=11 // pred_region
          _
        $region28: #{tpu_custom_call.1} parent=11 // pred_fallthru
          _
      $region12: #{tpu_custom_call.1} parent=5 // pred_fallthru
        _
      %p177 = scmp.lt.s32.totalorder %s14, 2
      // Predicated region
      $region29: #{tpu_custom_call.1} parent=5 // pred_check
        %p178 = pneg %p177
      $region30: #{tpu_custom_call.1} parent=5 // pred_check_branch
        %180 = sbr.rel (%p178) target = $region32
      $region31: #{tpu_custom_call.1} parent=5 // pred_region
        // Predicated region
        $region33: #{tpu_custom_call.1} parent=31 // pred_check
          %p181 = pneg %p34
        $region34: #{tpu_custom_call.1} parent=31 // pred_check_branch
          %183 = sbr.rel (%p181) target = $region36
        $region35: #{tpu_custom_call.1} parent=31 // pred_region
          %s184 = smul.u32 32, %s14
          %p185 = scmp.lt.s32.totalorder %s184, 63
          %s186 = scalar_select %p185, %s184, 63
          %s187 = smul.addr %s186, 8
          %s188 = scalar_lea.vmem %s0, %s187
          %s189 = smul.u32 32, %s14
        $region36: #{tpu_custom_call.1} parent=31 // pred_fallthru
          _
      $region32: #{tpu_custom_call.1} parent=5 // pred_fallthru
        _
      %p190 = scmp.le.s32.totalorder 1, %s14
      %p191 = scmp.lt.s32.totalorder %s14, 3
      %p192 = pnand %p190, %p191
      %p193 = pneg %p192
      // Predicated region
      $region37: #{tpu_custom_call.1} parent=5 // pred_check
        _
      $region38: #{tpu_custom_call.1} parent=5 // pred_check_branch
        %195 = sbr.rel (%p192) target = $region40
      $region39: #{tpu_custom_call.1} parent=5 // pred_region
        %s196 = ssub.s32 %s14, 1
        %s197 = smul.u32 32, %s19
        %p198 = scmp.lt.s32.totalorder %s197, 63
        %s199 = scalar_select %p198, %s197, 63
        %s200 = smul.addr %s199, 8
        %s201 = scalar_lea.vmem %s0, %s200
        %p202 = pneg %p40
        %p203 = pneg %p37
        %p204 = pneg %p61
        %p205 = pneg %p58
        %p206 = pneg %p82
        %p207 = pneg %p79
        %p208 = pneg %p103
        %p209 = pneg %p100
        %p210 = pneg %p124
        %p211 = pneg %p121
        %p212 = pneg %p150
        %p213 = pneg %p147
        %s214 = sand.u32 %s137, 1
        %s215 = scalar_lea.sflag [#allocation3], %s214
        %s216 = sand.u32 %s137, 1
        %s217 = smul.addr %s216, 16
        %s218 = scalar_lea.vmem [#allocation2], %s217
        %s219 = smul.u32 32, %s19
        %p220 = scmp.lt.s32.totalorder %s219, 63
        %s221 = scalar_select %p220, %s219, 63
        %s222 = smul.addr %s221, 8
        %s223 = scalar_lea.vmem %s0, %s222
        %s224 = smul.u32 32, %s19
        %s225 = smul.u32 2, %s19
        %v227 = vld [vmem:[%s223] sm:$0xff]
        %v228 = vld [vmem:[%s223 + $0x8] sm:$0xff]
        %v229 = vld [vmem:[%s223 + $0x10] sm:$0xff]
        %v230 = vld [vmem:[%s223 + $0x18] sm:$0xff]
        %v231 = vld [vmem:[%s223 + $0x20] sm:$0xff]
        %v232 = vld [vmem:[%s223 + $0x28] sm:$0xff]
        %v233 = vld [vmem:[%s223 + $0x30] sm:$0xff]
        %v234 = vld [vmem:[%s223 + $0x38] sm:$0xff]
        %v235 = vld [vmem:[%s223 + $0x40] sm:$0xff]
        %v236 = vld [vmem:[%s223 + $0x48] sm:$0xff]
        %v237 = vld [vmem:[%s223 + $0x50] sm:$0xff]
        %v238 = vld [vmem:[%s223 + $0x58] sm:$0xff]
        %v239 = vld [vmem:[%s223 + $0x60] sm:$0xff]
        %v240 = vld [vmem:[%s223 + $0x68] sm:$0xff]
        %v241 = vld [vmem:[%s223 + $0x70] sm:$0xff]
        %v242 = vld [vmem:[%s223 + $0x78] sm:$0xff]
        %v243 = vld [vmem:[%s223 + $0x80] sm:$0xff]
        %v244 = vld [vmem:[%s223 + $0x88] sm:$0xff]
        %v245 = vld [vmem:[%s223 + $0x90] sm:$0xff]
        %v246 = vld [vmem:[%s223 + $0x98] sm:$0xff]
        %v247 = vld [vmem:[%s223 + $0xa0] sm:$0xff]
        %v248 = vld [vmem:[%s223 + $0xa8] sm:$0xff]
        %v249 = vld [vmem:[%s223 + $0xb0] sm:$0xff]
        %v250 = vld [vmem:[%s223 + $0xb8] sm:$0xff]
        %v251 = vld [vmem:[%s223 + $0xc0] sm:$0xff]
        %v252 = vld [vmem:[%s223 + $0xc8] sm:$0xff]
        %v253 = vld [vmem:[%s223 + $0xd0] sm:$0xff]
        %v254 = vld [vmem:[%s223 + $0xd8] sm:$0xff]
        %v255 = vld [vmem:[%s223 + $0xe0] sm:$0xff]
        %v256 = vld [vmem:[%s223 + $0xe8] sm:$0xff]
        %v257 = vld [vmem:[%s223 + $0xf0] sm:$0xff]
        %v258 = vld [vmem:[%s223 + $0xf8] sm:$0xff]
        %v259 = vlaneseq
        %v260 = vand.u32 %v259, 127
        %261 = vset.pattern.permute.xlu0 0
        %262 = vperm.xlu0 %261, %v227
        %v263 = vpop.permute.xlu0 %262
        %264 = vset.pattern.permute.xlu0 0
        %265 = vperm.xlu0 %264, %v228
        %v266 = vpop.permute.xlu0 %265
        %267 = vset.pattern.permute.xlu0 0
        %268 = vperm.xlu0 %267, %v229
        %v269 = vpop.permute.xlu0 %268
        %270 = vset.pattern.permute.xlu0 0
        %271 = vperm.xlu0 %270, %v230
        %v272 = vpop.permute.xlu0 %271
        %273 = vset.pattern.permute.xlu0 0
        %274 = vperm.xlu0 %273, %v231
        %v275 = vpop.permute.xlu0 %274
        %276 = vset.pattern.permute.xlu0 0
        %277 = vperm.xlu0 %276, %v232
        %v278 = vpop.permute.xlu0 %277
        %279 = vset.pattern.permute.xlu0 0
        %280 = vperm.xlu0 %279, %v233
        %v281 = vpop.permute.xlu0 %280
        %282 = vset.pattern.permute.xlu0 0
        %283 = vperm.xlu0 %282, %v234
        %v284 = vpop.permute.xlu0 %283
        %285 = vset.pattern.permute.xlu0 0
        %286 = vperm.xlu0 %285, %v235
        %v287 = vpop.permute.xlu0 %286
        %288 = vset.pattern.permute.xlu0 0
        %289 = vperm.xlu0 %288, %v236
        %v290 = vpop.permute.xlu0 %289
        %291 = vset.pattern.permute.xlu0 0
        %292 = vperm.xlu0 %291, %v237
        %v293 = vpop.permute.xlu0 %292
        %294 = vset.pattern.permute.xlu0 0
        %295 = vperm.xlu0 %294, %v238
        %v296 = vpop.permute.xlu0 %295
        %297 = vset.pattern.permute.xlu0 0
        %298 = vperm.xlu0 %297, %v239
        %v299 = vpop.permute.xlu0 %298
        %300 = vset.pattern.permute.xlu0 0
        %301 = vperm.xlu0 %300, %v240
        %v302 = vpop.permute.xlu0 %301
        %303 = vset.pattern.permute.xlu0 0
        %304 = vperm.xlu0 %303, %v241
        %v305 = vpop.permute.xlu0 %304
        %306 = vset.pattern.permute.xlu0 0
        %307 = vperm.xlu0 %306, %v242
        %v308 = vpop.permute.xlu0 %307
        %309 = vset.pattern.permute.xlu0 0
        %310 = vperm.xlu0 %309, %v243
        %v311 = vpop.permute.xlu0 %310
        %312 = vset.pattern.permute.xlu0 0
        %313 = vperm.xlu0 %312, %v244
        %v314 = vpop.permute.xlu0 %313
        %315 = vset.pattern.permute.xlu0 0
        %316 = vperm.xlu0 %315, %v245
        %v317 = vpop.permute.xlu0 %316
        %318 = vset.pattern.permute.xlu0 0
        %319 = vperm.xlu0 %318, %v246
        %v320 = vpop.permute.xlu0 %319
        %321 = vset.pattern.permute.xlu0 0
        %322 = vperm.xlu0 %321, %v247
        %v323 = vpop.permute.xlu0 %322
        %324 = vset.pattern.permute.xlu0 0
        %325 = vperm.xlu0 %324, %v248
        %v326 = vpop.permute.xlu0 %325
        %327 = vset.pattern.permute.xlu0 0
        %328 = vperm.xlu0 %327, %v249
        %v329 = vpop.permute.xlu0 %328
        %330 = vset.pattern.permute.xlu0 0
        %331 = vperm.xlu0 %330, %v250
        %v332 = vpop.permute.xlu0 %331
        %333 = vset.pattern.permute.xlu0 0
        %334 = vperm.xlu0 %333, %v251
        %v335 = vpop.permute.xlu0 %334
        %336 = vset.pattern.permute.xlu0 0
        %337 = vperm.xlu0 %336, %v252
        %v338 = vpop.permute.xlu0 %337
        %339 = vset.pattern.permute.xlu0 0
        %340 = vperm.xlu0 %339, %v253
        %v341 = vpop.permute.xlu0 %340
        %342 = vset.pattern.permute.xlu0 0
        %343 = vperm.xlu0 %342, %v254
        %v344 = vpop.permute.xlu0 %343
        %345 = vset.pattern.permute.xlu0 0
        %346 = vperm.xlu0 %345, %v255
        %v347 = vpop.permute.xlu0 %346
        %348 = vset.pattern.permute.xlu0 0
        %349 = vperm.xlu0 %348, %v256
        %v350 = vpop.permute.xlu0 %349
        %351 = vset.pattern.permute.xlu0 0
        %352 = vperm.xlu0 %351, %v257
        %v353 = vpop.permute.xlu0 %352
        %354 = vset.pattern.permute.xlu0 0
        %355 = vperm.xlu0 %354, %v258
        %v356 = vpop.permute.xlu0 %355
        %vm357 = vcmp.eq.s32.totalorder %v263, %v260
        %vm358 = vcmp.eq.s32.totalorder %v266, %v260
        %vm359 = vcmp.eq.s32.totalorder %v269, %v260
        %vm360 = vcmp.eq.s32.totalorder %v272, %v260
        %vm361 = vcmp.eq.s32.totalorder %v275, %v260
        %vm362 = vcmp.eq.s32.totalorder %v278, %v260
        %vm363 = vcmp.eq.s32.totalorder %v281, %v260
        %vm364 = vcmp.eq.s32.totalorder %v284, %v260
        %vm365 = vcmp.eq.s32.totalorder %v287, %v260
        %vm366 = vcmp.eq.s32.totalorder %v290, %v260
        %vm367 = vcmp.eq.s32.totalorder %v293, %v260
        %vm368 = vcmp.eq.s32.totalorder %v296, %v260
        %vm369 = vcmp.eq.s32.totalorder %v299, %v260
        %vm370 = vcmp.eq.s32.totalorder %v302, %v260
        %vm371 = vcmp.eq.s32.totalorder %v305, %v260
        %vm372 = vcmp.eq.s32.totalorder %v308, %v260
        %vm373 = vcmp.eq.s32.totalorder %v311, %v260
        %vm374 = vcmp.eq.s32.totalorder %v314, %v260
        %vm375 = vcmp.eq.s32.totalorder %v317, %v260
        %vm376 = vcmp.eq.s32.totalorder %v320, %v260
        %vm377 = vcmp.eq.s32.totalorder %v323, %v260
        %vm378 = vcmp.eq.s32.totalorder %v326, %v260
        %vm379 = vcmp.eq.s32.totalorder %v329, %v260
        %vm380 = vcmp.eq.s32.totalorder %v332, %v260
        %vm381 = vcmp.eq.s32.totalorder %v335, %v260
        %vm382 = vcmp.eq.s32.totalorder %v338, %v260
        %vm383 = vcmp.eq.s32.totalorder %v341, %v260
        %vm384 = vcmp.eq.s32.totalorder %v344, %v260
        %vm385 = vcmp.eq.s32.totalorder %v347, %v260
        %vm386 = vcmp.eq.s32.totalorder %v350, %v260
        %vm387 = vcmp.eq.s32.totalorder %v353, %v260
        %vm388 = vcmp.eq.s32.totalorder %v356, %v260
        %v389 = vsel %vm357, 1.0, 0.0
        %v390 = vsel %vm358, 1.0, 0.0
        %v391 = vsel %vm359, 1.0, 0.0
        %v392 = vsel %vm360, 1.0, 0.0
        %v393 = vsel %vm361, 1.0, 0.0
        %v394 = vsel %vm362, 1.0, 0.0
        %v395 = vsel %vm363, 1.0, 0.0
        %v396 = vsel %vm364, 1.0, 0.0
        %v397 = vsel %vm365, 1.0, 0.0
        %v398 = vsel %vm366, 1.0, 0.0
        %v399 = vsel %vm367, 1.0, 0.0
        %v400 = vsel %vm368, 1.0, 0.0
        %v401 = vsel %vm369, 1.0, 0.0
        %v402 = vsel %vm370, 1.0, 0.0
        %v403 = vsel %vm371, 1.0, 0.0
        %v404 = vsel %vm372, 1.0, 0.0
        %v405 = vsel %vm373, 1.0, 0.0
        %v406 = vsel %vm374, 1.0, 0.0
        %v407 = vsel %vm375, 1.0, 0.0
        %v408 = vsel %vm376, 1.0, 0.0
        %v409 = vsel %vm377, 1.0, 0.0
        %v410 = vsel %vm378, 1.0, 0.0
        %v411 = vsel %vm379, 1.0, 0.0
        %v412 = vsel %vm380, 1.0, 0.0
        %v413 = vsel %vm381, 1.0, 0.0
        %v414 = vsel %vm382, 1.0, 0.0
        %v415 = vsel %vm383, 1.0, 0.0
        %v416 = vsel %vm384, 1.0, 0.0
        %v417 = vsel %vm385, 1.0, 0.0
        %v418 = vsel %vm386, 1.0, 0.0
        %v419 = vsel %vm387, 1.0, 0.0
        %v420 = vsel %vm388, 1.0, 0.0
        %v421 = vpack.c.bf16 %v390, %v389
        %v422 = vpack.c.bf16 %v392, %v391
        %v423 = vpack.c.bf16 %v394, %v393
        %v424 = vpack.c.bf16 %v396, %v395
        %v425 = vpack.c.bf16 %v398, %v397
        %v426 = vpack.c.bf16 %v400, %v399
        %v427 = vpack.c.bf16 %v402, %v401
        %v428 = vpack.c.bf16 %v404, %v403
        %v429 = vpack.c.bf16 %v406, %v405
        %v430 = vpack.c.bf16 %v408, %v407
        %v431 = vpack.c.bf16 %v410, %v409
        %v432 = vpack.c.bf16 %v412, %v411
        %v433 = vpack.c.bf16 %v414, %v413
        %v434 = vpack.c.bf16 %v416, %v415
        %v435 = vpack.c.bf16 %v418, %v417
        %v436 = vpack.c.bf16 %v420, %v419
        %v437 = vld [vmem:[%s1] sm:$0xf]
        %v438 = vld [vmem:[%s1 + $0x4] sm:$0xf]
        %v439 = vld [vmem:[%s1 + $0x8] sm:$0xf]
        %v440 = vld [vmem:[%s1 + $0xc] sm:$0xf]
        %v441 = vld [vmem:[%s1 + $0x10] sm:$0xf]
        %v442 = vld [vmem:[%s1 + $0x14] sm:$0xf]
        %v443 = vld [vmem:[%s1 + $0x18] sm:$0xf]
        %v444 = vld [vmem:[%s1 + $0x1c] sm:$0xf]
        %v445 = vld [vmem:[%s1 + $0x20] sm:$0xf]
        %v446 = vld [vmem:[%s1 + $0x24] sm:$0xf]
        %v447 = vld [vmem:[%s1 + $0x28] sm:$0xf]
        %v448 = vld [vmem:[%s1 + $0x2c] sm:$0xf]
        %v449 = vld [vmem:[%s1 + $0x30] sm:$0xf]
        %v450 = vld [vmem:[%s1 + $0x34] sm:$0xf]
        %v451 = vld [vmem:[%s1 + $0x38] sm:$0xf]
        %v452 = vld [vmem:[%s1 + $0x3c] sm:$0xf]
        %v469 = vunpack.c.l.b16 %v437
        %v470 = vunpack.c.l.b16 %v438
        %v471 = vunpack.c.l.b16 %v439
        %v472 = vunpack.c.l.b16 %v440
        %v473 = vunpack.c.l.b16 %v441
        %v474 = vunpack.c.l.b16 %v442
        %v475 = vunpack.c.l.b16 %v443
        %v476 = vunpack.c.l.b16 %v444
        %v477 = vunpack.c.l.b16 %v445
        %v478 = vunpack.c.l.b16 %v446
        %v479 = vunpack.c.l.b16 %v447
        %v480 = vunpack.c.l.b16 %v448
        %v481 = vunpack.c.l.b16 %v449
        %v482 = vunpack.c.l.b16 %v450
        %v483 = vunpack.c.l.b16 %v451
        %v484 = vunpack.c.l.b16 %v452
        %v485 = vpack.c.b16 %v470, %v469
        %v486 = vpack.c.b16 %v472, %v471
        %v487 = vpack.c.b16 %v474, %v473
        %v488 = vpack.c.b16 %v476, %v475
        %v489 = vpack.c.b16 %v478, %v477
        %v490 = vpack.c.b16 %v480, %v479
        %v491 = vpack.c.b16 %v482, %v481
        %v492 = vpack.c.b16 %v484, %v483
        %501 = vmatprep.subr.bf16.mxu0 0
        %502 = vmatpush1.bf16.msra.mxu0 %v492
        %503 = vmatprep.subr.bf16.mxu0 0
        %504 = vmatpush1.bf16.msra.mxu0 %v491
        %505 = vmatprep.subr.bf16.mxu0 0
        %506 = vmatpush1.bf16.msra.mxu0 %v490
        %507 = vmatprep.subr.bf16.mxu0 0
        %508 = vmatpush1.bf16.msra.mxu0 %v489
        %509 = vmatprep.subr.bf16.mxu0 0
        %510 = vmatpush1.bf16.msra.mxu0 %v488
        %511 = vmatprep.subr.bf16.mxu0 0
        %512 = vmatpush1.bf16.msra.mxu0 %v487
        %513 = vmatprep.subr.bf16.mxu0 0
        %514 = vmatpush1.bf16.msra.mxu0 %v486
        %515 = vmatprep.subr.bf16.mxu0 0
        %516 = vmatpush1.bf16.msra.mxu0 %v485
        %517 = vmatprep.subr.bf16.mxu0 0
        %518 = vmatpush2.bf16.msra.mxu0 0
        %519 = vmatprep.subr.bf16.mxu0 0
        %520 = vmatpush2.bf16.msra.mxu0 0
        %521 = vmatprep.subr.bf16.mxu0 0
        %522 = vmatpush2.bf16.msra.mxu0 0
        %523 = vmatprep.subr.bf16.mxu0 0
        %524 = vmatpush2.bf16.msra.mxu0 0
        %525 = vmatprep.subr.bf16.mxu0 0
        %526 = vmatpush2.bf16.msra.mxu0 0
        %527 = vmatprep.subr.bf16.mxu0 0
        %528 = vmatpush2.bf16.msra.mxu0 0
        %529 = vmatprep.subr.bf16.mxu0 0
        %530 = vmatpush2.bf16.msra.mxu0 0
        %531 = vmatprep.subr.bf16.mxu0 0
        %532 = vmatpush2.bf16.msra.mxu0 0
        %533 = vmatprep.mubr.bf16.mxu0 0
        %534 = vmatmul.mubr.bf16.gmra.mxu0 %v421
        %v535 = vpop.f32.mrf.mxu0
        %v536 = vadd.f32 0.0, %v535
        %v537 = vpop.f32.mrf.mxu0
        %v538 = vpop.f32.mrf.mxu0
        %v539 = vadd.f32 0.0, %v538
        %v540 = vpop.f32.mrf.mxu0
        %541 = vmatprep.mubr.bf16.mxu0 0
        %542 = vmatmul.mubr.bf16.gmra.mxu0 %v422
        %v543 = vpop.f32.mrf.mxu0
        %v544 = vadd.f32 0.0, %v543
        %v545 = vpop.f32.mrf.mxu0
        %v546 = vpop.f32.mrf.mxu0
        %v547 = vadd.f32 0.0, %v546
        %v548 = vpop.f32.mrf.mxu0
        %549 = vmatprep.mubr.bf16.mxu0 0
        %550 = vmatmul.mubr.bf16.gmra.mxu0 %v423
        %v551 = vpop.f32.mrf.mxu0
        %v552 = vadd.f32 0.0, %v551
        %v553 = vpop.f32.mrf.mxu0
        %v554 = vpop.f32.mrf.mxu0
        %v555 = vadd.f32 0.0, %v554
        %v556 = vpop.f32.mrf.mxu0
        %557 = vmatprep.mubr.bf16.mxu0 0
        %558 = vmatmul.mubr.bf16.gmra.mxu0 %v424
        %v559 = vpop.f32.mrf.mxu0
        %v560 = vadd.f32 0.0, %v559
        %v561 = vpop.f32.mrf.mxu0
        %v562 = vpop.f32.mrf.mxu0
        %v563 = vadd.f32 0.0, %v562
        %v564 = vpop.f32.mrf.mxu0
        %565 = vmatprep.mubr.bf16.mxu0 0
        %566 = vmatmul.mubr.bf16.gmra.mxu0 %v425
        %v567 = vpop.f32.mrf.mxu0
        %v568 = vadd.f32 0.0, %v567
        %v569 = vpop.f32.mrf.mxu0
        %v570 = vpop.f32.mrf.mxu0
        %v571 = vadd.f32 0.0, %v570
        %v572 = vpop.f32.mrf.mxu0
        %573 = vmatprep.mubr.bf16.mxu0 0
        %574 = vmatmul.mubr.bf16.gmra.mxu0 %v426
        %v575 = vpop.f32.mrf.mxu0
        %v576 = vadd.f32 0.0, %v575
        %v577 = vpop.f32.mrf.mxu0
        %v578 = vpop.f32.mrf.mxu0
        %v579 = vadd.f32 0.0, %v578
        %v580 = vpop.f32.mrf.mxu0
        %581 = vmatprep.mubr.bf16.mxu0 0
        %582 = vmatmul.mubr.bf16.gmra.mxu0 %v427
        %v583 = vpop.f32.mrf.mxu0
        %v584 = vadd.f32 0.0, %v583
        %v585 = vpop.f32.mrf.mxu0
        %v586 = vpop.f32.mrf.mxu0
        %v587 = vadd.f32 0.0, %v586
        %v588 = vpop.f32.mrf.mxu0
        %589 = vmatprep.mubr.bf16.mxu0 0
        %590 = vmatmul.mubr.bf16.gmra.mxu0 %v428
        %v591 = vpop.f32.mrf.mxu0
        %v592 = vadd.f32 0.0, %v591
        %v593 = vpop.f32.mrf.mxu0
        %v594 = vpop.f32.mrf.mxu0
        %v595 = vadd.f32 0.0, %v594
        %v596 = vpop.f32.mrf.mxu0
        %597 = vmatprep.mubr.bf16.mxu0 0
        %598 = vmatmul.mubr.bf16.gmra.mxu0 %v429
        %v599 = vpop.f32.mrf.mxu0
        %v600 = vadd.f32 0.0, %v599
        %v601 = vpop.f32.mrf.mxu0
        %v602 = vpop.f32.mrf.mxu0
        %v603 = vadd.f32 0.0, %v602
        %v604 = vpop.f32.mrf.mxu0
        %605 = vmatprep.mubr.bf16.mxu0 0
        %606 = vmatmul.mubr.bf16.gmra.mxu0 %v430
        %v607 = vpop.f32.mrf.mxu0
        %v608 = vadd.f32 0.0, %v607
        %v609 = vpop.f32.mrf.mxu0
        %v610 = vpop.f32.mrf.mxu0
        %v611 = vadd.f32 0.0, %v610
        %v612 = vpop.f32.mrf.mxu0
        %613 = vmatprep.mubr.bf16.mxu0 0
        %614 = vmatmul.mubr.bf16.gmra.mxu0 %v431
        %v615 = vpop.f32.mrf.mxu0
        %v616 = vadd.f32 0.0, %v615
        %v617 = vpop.f32.mrf.mxu0
        %v618 = vpop.f32.mrf.mxu0
        %v619 = vadd.f32 0.0, %v618
        %v620 = vpop.f32.mrf.mxu0
        %621 = vmatprep.mubr.bf16.mxu0 0
        %622 = vmatmul.mubr.bf16.gmra.mxu0 %v432
        %v623 = vpop.f32.mrf.mxu0
        %v624 = vadd.f32 0.0, %v623
        %v625 = vpop.f32.mrf.mxu0
        %v626 = vpop.f32.mrf.mxu0
        %v627 = vadd.f32 0.0, %v626
        %v628 = vpop.f32.mrf.mxu0
        %629 = vmatprep.mubr.bf16.mxu0 0
        %630 = vmatmul.mubr.bf16.gmra.mxu0 %v433
        %v631 = vpop.f32.mrf.mxu0
        %v632 = vadd.f32 0.0, %v631
        %v633 = vpop.f32.mrf.mxu0
        %v634 = vpop.f32.mrf.mxu0
        %v635 = vadd.f32 0.0, %v634
        %v636 = vpop.f32.mrf.mxu0
        %637 = vmatprep.mubr.bf16.mxu0 0
        %638 = vmatmul.mubr.bf16.gmra.mxu0 %v434
        %v639 = vpop.f32.mrf.mxu0
        %v640 = vadd.f32 0.0, %v639
        %v641 = vpop.f32.mrf.mxu0
        %v642 = vpop.f32.mrf.mxu0
        %v643 = vadd.f32 0.0, %v642
        %v644 = vpop.f32.mrf.mxu0
        %645 = vmatprep.mubr.bf16.mxu0 0
        %646 = vmatmul.mubr.bf16.gmra.mxu0 %v435
        %v647 = vpop.f32.mrf.mxu0
        %v648 = vadd.f32 0.0, %v647
        %v649 = vpop.f32.mrf.mxu0
        %v650 = vpop.f32.mrf.mxu0
        %v651 = vadd.f32 0.0, %v650
        %v652 = vpop.f32.mrf.mxu0
        %653 = vmatprep.mubr.bf16.mxu0 0
        %654 = vmatmul.mubr.bf16.gmra.mxu0 %v436
        %v655 = vpop.f32.mrf.mxu0
        %v656 = vadd.f32 0.0, %v655
        %v657 = vpop.f32.mrf.mxu0
        %v658 = vpop.f32.mrf.mxu0
        %v659 = vadd.f32 0.0, %v658
        %v660 = vpop.f32.mrf.mxu0
        %661 = vdwg.mxu0
        %vm694 = vcmask 1046528
        %v695 = vrot.slane %v536, 1
        %v696 = vrot.slane %v539, 1
        %v697 = vsel %vm694, %v695, %v696
        %v698 = vrot.slane %v544, 1
        %v699 = vrot.slane %v547, 1
        %v700 = vsel %vm694, %v698, %v699
        %v701 = vrot.slane %v552, 1
        %v702 = vrot.slane %v555, 1
        %v703 = vsel %vm694, %v701, %v702
        %v704 = vrot.slane %v560, 1
        %v705 = vrot.slane %v563, 1
        %v706 = vsel %vm694, %v704, %v705
        %v707 = vrot.slane %v568, 1
        %v708 = vrot.slane %v571, 1
        %v709 = vsel %vm694, %v707, %v708
        %v710 = vrot.slane %v576, 1
        %v711 = vrot.slane %v579, 1
        %v712 = vsel %vm694, %v710, %v711
        %v713 = vrot.slane %v584, 1
        %v714 = vrot.slane %v587, 1
        %v715 = vsel %vm694, %v713, %v714
        %v716 = vrot.slane %v592, 1
        %v717 = vrot.slane %v595, 1
        %v718 = vsel %vm694, %v716, %v717
        %v719 = vrot.slane %v600, 1
        %v720 = vrot.slane %v603, 1
        %v721 = vsel %vm694, %v719, %v720
        %v722 = vrot.slane %v608, 1
        %v723 = vrot.slane %v611, 1
        %v724 = vsel %vm694, %v722, %v723
        %v725 = vrot.slane %v616, 1
        %v726 = vrot.slane %v619, 1
        %v727 = vsel %vm694, %v725, %v726
        %v728 = vrot.slane %v624, 1
        %v729 = vrot.slane %v627, 1
        %v730 = vsel %vm694, %v728, %v729
        %v731 = vrot.slane %v632, 1
        %v732 = vrot.slane %v635, 1
        %v733 = vsel %vm694, %v731, %v732
        %v734 = vrot.slane %v640, 1
        %v735 = vrot.slane %v643, 1
        %v736 = vsel %vm694, %v734, %v735
        %v737 = vrot.slane %v648, 1
        %v738 = vrot.slane %v651, 1
        %v739 = vsel %vm694, %v737, %v738
        %v740 = vrot.slane %v656, 1
        %v741 = vrot.slane %v659, 1
        %v742 = vsel %vm694, %v740, %v741
        %743 = vrot.lane.b32.xlu0 %v697, 104
        %v744 = vpop.permute.xlu0 %743
        %745 = vrot.lane.b32.xlu0 %v700, 104
        %v746 = vpop.permute.xlu0 %745
        %747 = vrot.lane.b32.xlu0 %v703, 104
        %v748 = vpop.permute.xlu0 %747
        %749 = vrot.lane.b32.xlu0 %v706, 104
        %v750 = vpop.permute.xlu0 %749
        %751 = vrot.lane.b32.xlu0 %v709, 104
        %v752 = vpop.permute.xlu0 %751
        %753 = vrot.lane.b32.xlu0 %v712, 104
        %v754 = vpop.permute.xlu0 %753
        %755 = vrot.lane.b32.xlu0 %v715, 104
        %v756 = vpop.permute.xlu0 %755
        %757 = vrot.lane.b32.xlu0 %v718, 104
        %v758 = vpop.permute.xlu0 %757
        %759 = vrot.lane.b32.xlu0 %v721, 104
        %v760 = vpop.permute.xlu0 %759
        %761 = vrot.lane.b32.xlu0 %v724, 104
        %v762 = vpop.permute.xlu0 %761
        %763 = vrot.lane.b32.xlu0 %v727, 104
        %v764 = vpop.permute.xlu0 %763
        %765 = vrot.lane.b32.xlu0 %v730, 104
        %v766 = vpop.permute.xlu0 %765
        %767 = vrot.lane.b32.xlu0 %v733, 104
        %v768 = vpop.permute.xlu0 %767
        %769 = vrot.lane.b32.xlu0 %v736, 104
        %v770 = vpop.permute.xlu0 %769
        %771 = vrot.lane.b32.xlu0 %v739, 104
        %v772 = vpop.permute.xlu0 %771
        %773 = vrot.lane.b32.xlu0 %v742, 104
        %v774 = vpop.permute.xlu0 %773
        %v791 = vadd.f32 %v536, %v744
        %v792 = vadd.f32 %v544, %v746
        %v793 = vadd.f32 %v552, %v748
        %v794 = vadd.f32 %v560, %v750
        %v795 = vadd.f32 %v568, %v752
        %v796 = vadd.f32 %v576, %v754
        %v797 = vadd.f32 %v584, %v756
        %v798 = vadd.f32 %v592, %v758
        %v799 = vadd.f32 %v600, %v760
        %v800 = vadd.f32 %v608, %v762
        %v801 = vadd.f32 %v616, %v764
        %v802 = vadd.f32 %v624, %v766
        %v803 = vadd.f32 %v632, %v768
        %v804 = vadd.f32 %v640, %v770
        %v805 = vadd.f32 %v648, %v772
        %v806 = vadd.f32 %v656, %v774
        %vm807 = vcmask 1045504
        %v808 = vrot.slane %v536, 2
        %v809 = vrot.slane %v539, 2
        %v810 = vsel %vm807, %v808, %v809
        %v811 = vrot.slane %v544, 2
        %v812 = vrot.slane %v547, 2
        %v813 = vsel %vm807, %v811, %v812
        %v814 = vrot.slane %v552, 2
        %v815 = vrot.slane %v555, 2
        %v816 = vsel %vm807, %v814, %v815
        %v817 = vrot.slane %v560, 2
        %v818 = vrot.slane %v563, 2
        %v819 = vsel %vm807, %v817, %v818
        %v820 = vrot.slane %v568, 2
        %v821 = vrot.slane %v571, 2
        %v822 = vsel %vm807, %v820, %v821
        %v823 = vrot.slane %v576, 2
        %v824 = vrot.slane %v579, 2
        %v825 = vsel %vm807, %v823, %v824
        %v826 = vrot.slane %v584, 2
        %v827 = vrot.slane %v587, 2
        %v828 = vsel %vm807, %v826, %v827
        %v829 = vrot.slane %v592, 2
        %v830 = vrot.slane %v595, 2
        %v831 = vsel %vm807, %v829, %v830
        %v832 = vrot.slane %v600, 2
        %v833 = vrot.slane %v603, 2
        %v834 = vsel %vm807, %v832, %v833
        %v835 = vrot.slane %v608, 2
        %v836 = vrot.slane %v611, 2
        %v837 = vsel %vm807, %v835, %v836
        %v838 = vrot.slane %v616, 2
        %v839 = vrot.slane %v619, 2
        %v840 = vsel %vm807, %v838, %v839
        %v841 = vrot.slane %v624, 2
        %v842 = vrot.slane %v627, 2
        %v843 = vsel %vm807, %v841, %v842
        %v844 = vrot.slane %v632, 2
        %v845 = vrot.slane %v635, 2
        %v846 = vsel %vm807, %v844, %v845
        %v847 = vrot.slane %v640, 2
        %v848 = vrot.slane %v643, 2
        %v849 = vsel %vm807, %v847, %v848
        %v850 = vrot.slane %v648, 2
        %v851 = vrot.slane %v651, 2
        %v852 = vsel %vm807, %v850, %v851
        %v853 = vrot.slane %v656, 2
        %v854 = vrot.slane %v659, 2
        %v855 = vsel %vm807, %v853, %v854
        %856 = vrot.lane.b32.xlu0 %v810, 80
        %v857 = vpop.permute.xlu0 %856
        %858 = vrot.lane.b32.xlu0 %v813, 80
        %v859 = vpop.permute.xlu0 %858
        %860 = vrot.lane.b32.xlu0 %v816, 80
        %v861 = vpop.permute.xlu0 %860
        %862 = vrot.lane.b32.xlu0 %v819, 80
        %v863 = vpop.permute.xlu0 %862
        %864 = vrot.lane.b32.xlu0 %v822, 80
        %v865 = vpop.permute.xlu0 %864
        %866 = vrot.lane.b32.xlu0 %v825, 80
        %v867 = vpop.permute.xlu0 %866
        %868 = vrot.lane.b32.xlu0 %v828, 80
        %v869 = vpop.permute.xlu0 %868
        %870 = vrot.lane.b32.xlu0 %v831, 80
        %v871 = vpop.permute.xlu0 %870
        %872 = vrot.lane.b32.xlu0 %v834, 80
        %v873 = vpop.permute.xlu0 %872
        %874 = vrot.lane.b32.xlu0 %v837, 80
        %v875 = vpop.permute.xlu0 %874
        %876 = vrot.lane.b32.xlu0 %v840, 80
        %v877 = vpop.permute.xlu0 %876
        %878 = vrot.lane.b32.xlu0 %v843, 80
        %v879 = vpop.permute.xlu0 %878
        %880 = vrot.lane.b32.xlu0 %v846, 80
        %v881 = vpop.permute.xlu0 %880
        %882 = vrot.lane.b32.xlu0 %v849, 80
        %v883 = vpop.permute.xlu0 %882
        %884 = vrot.lane.b32.xlu0 %v852, 80
        %v885 = vpop.permute.xlu0 %884
        %886 = vrot.lane.b32.xlu0 %v855, 80
        %v887 = vpop.permute.xlu0 %886
        %v904 = vadd.f32 %v791, %v857
        %v905 = vadd.f32 %v792, %v859
        %v906 = vadd.f32 %v793, %v861
        %v907 = vadd.f32 %v794, %v863
        %v908 = vadd.f32 %v795, %v865
        %v909 = vadd.f32 %v796, %v867
        %v910 = vadd.f32 %v797, %v869
        %v911 = vadd.f32 %v798, %v871
        %v912 = vadd.f32 %v799, %v873
        %v913 = vadd.f32 %v800, %v875
        %v914 = vadd.f32 %v801, %v877
        %v915 = vadd.f32 %v802, %v879
        %v916 = vadd.f32 %v803, %v881
        %v917 = vadd.f32 %v804, %v883
        %v918 = vadd.f32 %v805, %v885
        %v919 = vadd.f32 %v806, %v887
        %vm920 = vcmask 1044480
        %v921 = vrot.slane %v536, 3
        %v922 = vrot.slane %v539, 3
        %v923 = vsel %vm920, %v921, %v922
        %v924 = vrot.slane %v544, 3
        %v925 = vrot.slane %v547, 3
        %v926 = vsel %vm920, %v924, %v925
        %v927 = vrot.slane %v552, 3
        %v928 = vrot.slane %v555, 3
        %v929 = vsel %vm920, %v927, %v928
        %v930 = vrot.slane %v560, 3
        %v931 = vrot.slane %v563, 3
        %v932 = vsel %vm920, %v930, %v931
        %v933 = vrot.slane %v568, 3
        %v934 = vrot.slane %v571, 3
        %v935 = vsel %vm920, %v933, %v934
        %v936 = vrot.slane %v576, 3
        %v937 = vrot.slane %v579, 3
        %v938 = vsel %vm920, %v936, %v937
        %v939 = vrot.slane %v584, 3
        %v940 = vrot.slane %v587, 3
        %v941 = vsel %vm920, %v939, %v940
        %v942 = vrot.slane %v592, 3
        %v943 = vrot.slane %v595, 3
        %v944 = vsel %vm920, %v942, %v943
        %v945 = vrot.slane %v600, 3
        %v946 = vrot.slane %v603, 3
        %v947 = vsel %vm920, %v945, %v946
        %v948 = vrot.slane %v608, 3
        %v949 = vrot.slane %v611, 3
        %v950 = vsel %vm920, %v948, %v949
        %v951 = vrot.slane %v616, 3
        %v952 = vrot.slane %v619, 3
        %v953 = vsel %vm920, %v951, %v952
        %v954 = vrot.slane %v624, 3
        %v955 = vrot.slane %v627, 3
        %v956 = vsel %vm920, %v954, %v955
        %v957 = vrot.slane %v632, 3
        %v958 = vrot.slane %v635, 3
        %v959 = vsel %vm920, %v957, %v958
        %v960 = vrot.slane %v640, 3
        %v961 = vrot.slane %v643, 3
        %v962 = vsel %vm920, %v960, %v961
        %v963 = vrot.slane %v648, 3
        %v964 = vrot.slane %v651, 3
        %v965 = vsel %vm920, %v963, %v964
        %v966 = vrot.slane %v656, 3
        %v967 = vrot.slane %v659, 3
        %v968 = vsel %vm920, %v966, %v967
        %969 = vrot.lane.b32.xlu0 %v923, 56
        %v970 = vpop.permute.xlu0 %969
        %971 = vrot.lane.b32.xlu0 %v926, 56
        %v972 = vpop.permute.xlu0 %971
        %973 = vrot.lane.b32.xlu0 %v929, 56
        %v974 = vpop.permute.xlu0 %973
        %975 = vrot.lane.b32.xlu0 %v932, 56
        %v976 = vpop.permute.xlu0 %975
        %977 = vrot.lane.b32.xlu0 %v935, 56
        %v978 = vpop.permute.xlu0 %977
        %979 = vrot.lane.b32.xlu0 %v938, 56
        %v980 = vpop.permute.xlu0 %979
        %981 = vrot.lane.b32.xlu0 %v941, 56
        %v982 = vpop.permute.xlu0 %981
        %983 = vrot.lane.b32.xlu0 %v944, 56
        %v984 = vpop.permute.xlu0 %983
        %985 = vrot.lane.b32.xlu0 %v947, 56
        %v986 = vpop.permute.xlu0 %985
        %987 = vrot.lane.b32.xlu0 %v950, 56
        %v988 = vpop.permute.xlu0 %987
        %989 = vrot.lane.b32.xlu0 %v953, 56
        %v990 = vpop.permute.xlu0 %989
        %991 = vrot.lane.b32.xlu0 %v956, 56
        %v992 = vpop.permute.xlu0 %991
        %993 = vrot.lane.b32.xlu0 %v959, 56
        %v994 = vpop.permute.xlu0 %993
        %995 = vrot.lane.b32.xlu0 %v962, 56
        %v996 = vpop.permute.xlu0 %995
        %997 = vrot.lane.b32.xlu0 %v965, 56
        %v998 = vpop.permute.xlu0 %997
        %999 = vrot.lane.b32.xlu0 %v968, 56
        %v1000 = vpop.permute.xlu0 %999
        %v1017 = vadd.f32 %v904, %v970
        %v1018 = vadd.f32 %v905, %v972
        %v1019 = vadd.f32 %v906, %v974
        %v1020 = vadd.f32 %v907, %v976
        %v1021 = vadd.f32 %v908, %v978
        %v1022 = vadd.f32 %v909, %v980
        %v1023 = vadd.f32 %v910, %v982
        %v1024 = vadd.f32 %v911, %v984
        %v1025 = vadd.f32 %v912, %v986
        %v1026 = vadd.f32 %v913, %v988
        %v1027 = vadd.f32 %v914, %v990
        %v1028 = vadd.f32 %v915, %v992
        %v1029 = vadd.f32 %v916, %v994
        %v1030 = vadd.f32 %v917, %v996
        %v1031 = vadd.f32 %v918, %v998
        %v1032 = vadd.f32 %v919, %v1000
        %v1033 = vmax.f32 %v1017, 0.0
        %v1034 = vmax.f32 %v1018, 0.0
        %v1035 = vmax.f32 %v1019, 0.0
        %v1036 = vmax.f32 %v1020, 0.0
        %v1037 = vmax.f32 %v1021, 0.0
        %v1038 = vmax.f32 %v1022, 0.0
        %v1039 = vmax.f32 %v1023, 0.0
        %v1040 = vmax.f32 %v1024, 0.0
        %v1041 = vmax.f32 %v1025, 0.0
        %v1042 = vmax.f32 %v1026, 0.0
        %v1043 = vmax.f32 %v1027, 0.0
        %v1044 = vmax.f32 %v1028, 0.0
        %v1045 = vmax.f32 %v1029, 0.0
        %v1046 = vmax.f32 %v1030, 0.0
        %v1047 = vmax.f32 %v1031, 0.0
        %v1048 = vmax.f32 %v1032, 0.0
        %v1049 = vld [vmem:[%s2] sm:$0xff]
        %v1050 = vmul.f32 %v1033, %v1049
        %v1051 = vmul.f32 %v1034, %v1049
        %v1052 = vmul.f32 %v1035, %v1049
        %v1053 = vmul.f32 %v1036, %v1049
        %v1054 = vmul.f32 %v1037, %v1049
        %v1055 = vmul.f32 %v1038, %v1049
        %v1056 = vmul.f32 %v1039, %v1049
        %v1057 = vmul.f32 %v1040, %v1049
        %v1058 = vmul.f32 %v1041, %v1049
        %v1059 = vmul.f32 %v1042, %v1049
        %v1060 = vmul.f32 %v1043, %v1049
        %v1061 = vmul.f32 %v1044, %v1049
        %v1062 = vmul.f32 %v1045, %v1049
        %v1063 = vmul.f32 %v1046, %v1049
        %v1064 = vmul.f32 %v1047, %v1049
        %v1065 = vmul.f32 %v1048, %v1049
        %vm1066 = vcmask 195584
        %v1067 = vsel %vm1066, %v1050, -inf
        %v1068 = vrot.slane %v1067, 4
        %v1069 = vmax.f32 %v1067, %v1068
        %v1070 = vrot.slane %v1069, 2
        %v1071 = vmax.f32 %v1069, %v1070
        %v1072 = vrot.slane %v1071, 1
        %v1073 = vmax.f32 %v1071, %v1072
        %v1074 = vsel %vm1066, %v1051, -inf
        %v1075 = vrot.slane %v1074, 4
        %v1076 = vmax.f32 %v1074, %v1075
        %v1077 = vrot.slane %v1076, 2
        %v1078 = vmax.f32 %v1076, %v1077
        %v1079 = vrot.slane %v1078, 1
        %v1080 = vmax.f32 %v1078, %v1079
        %v1081 = vsel %vm1066, %v1052, -inf
        %v1082 = vrot.slane %v1081, 4
        %v1083 = vmax.f32 %v1081, %v1082
        %v1084 = vrot.slane %v1083, 2
        %v1085 = vmax.f32 %v1083, %v1084
        %v1086 = vrot.slane %v1085, 1
        %v1087 = vmax.f32 %v1085, %v1086
        %v1088 = vsel %vm1066, %v1053, -inf
        %v1089 = vrot.slane %v1088, 4
        %v1090 = vmax.f32 %v1088, %v1089
        %v1091 = vrot.slane %v1090, 2
        %v1092 = vmax.f32 %v1090, %v1091
        %v1093 = vrot.slane %v1092, 1
        %v1094 = vmax.f32 %v1092, %v1093
        %v1095 = vsel %vm1066, %v1054, -inf
        %v1096 = vrot.slane %v1095, 4
        %v1097 = vmax.f32 %v1095, %v1096
        %v1098 = vrot.slane %v1097, 2
        %v1099 = vmax.f32 %v1097, %v1098
        %v1100 = vrot.slane %v1099, 1
        %v1101 = vmax.f32 %v1099, %v1100
        %v1102 = vsel %vm1066, %v1055, -inf
        %v1103 = vrot.slane %v1102, 4
        %v1104 = vmax.f32 %v1102, %v1103
        %v1105 = vrot.slane %v1104, 2
        %v1106 = vmax.f32 %v1104, %v1105
        %v1107 = vrot.slane %v1106, 1
        %v1108 = vmax.f32 %v1106, %v1107
        %v1109 = vsel %vm1066, %v1056, -inf
        %v1110 = vrot.slane %v1109, 4
        %v1111 = vmax.f32 %v1109, %v1110
        %v1112 = vrot.slane %v1111, 2
        %v1113 = vmax.f32 %v1111, %v1112
        %v1114 = vrot.slane %v1113, 1
        %v1115 = vmax.f32 %v1113, %v1114
        %v1116 = vsel %vm1066, %v1057, -inf
        %v1117 = vrot.slane %v1116, 4
        %v1118 = vmax.f32 %v1116, %v1117
        %v1119 = vrot.slane %v1118, 2
        %v1120 = vmax.f32 %v1118, %v1119
        %v1121 = vrot.slane %v1120, 1
        %v1122 = vmax.f32 %v1120, %v1121
        %v1123 = vsel %vm1066, %v1058, -inf
        %v1124 = vrot.slane %v1123, 4
        %v1125 = vmax.f32 %v1123, %v1124
        %v1126 = vrot.slane %v1125, 2
        %v1127 = vmax.f32 %v1125, %v1126
        %v1128 = vrot.slane %v1127, 1
        %v1129 = vmax.f32 %v1127, %v1128
        %v1130 = vsel %vm1066, %v1059, -inf
        %v1131 = vrot.slane %v1130, 4
        %v1132 = vmax.f32 %v1130, %v1131
        %v1133 = vrot.slane %v1132, 2
        %v1134 = vmax.f32 %v1132, %v1133
        %v1135 = vrot.slane %v1134, 1
        %v1136 = vmax.f32 %v1134, %v1135
        %v1137 = vsel %vm1066, %v1060, -inf
        %v1138 = vrot.slane %v1137, 4
        %v1139 = vmax.f32 %v1137, %v1138
        %v1140 = vrot.slane %v1139, 2
        %v1141 = vmax.f32 %v1139, %v1140
        %v1142 = vrot.slane %v1141, 1
        %v1143 = vmax.f32 %v1141, %v1142
        %v1144 = vsel %vm1066, %v1061, -inf
        %v1145 = vrot.slane %v1144, 4
        %v1146 = vmax.f32 %v1144, %v1145
        %v1147 = vrot.slane %v1146, 2
        %v1148 = vmax.f32 %v1146, %v1147
        %v1149 = vrot.slane %v1148, 1
        %v1150 = vmax.f32 %v1148, %v1149
        %v1151 = vsel %vm1066, %v1062, -inf
        %v1152 = vrot.slane %v1151, 4
        %v1153 = vmax.f32 %v1151, %v1152
        %v1154 = vrot.slane %v1153, 2
        %v1155 = vmax.f32 %v1153, %v1154
        %v1156 = vrot.slane %v1155, 1
        %v1157 = vmax.f32 %v1155, %v1156
        %v1158 = vsel %vm1066, %v1063, -inf
        %v1159 = vrot.slane %v1158, 4
        %v1160 = vmax.f32 %v1158, %v1159
        %v1161 = vrot.slane %v1160, 2
        %v1162 = vmax.f32 %v1160, %v1161
        %v1163 = vrot.slane %v1162, 1
        %v1164 = vmax.f32 %v1162, %v1163
        %v1165 = vsel %vm1066, %v1064, -inf
        %v1166 = vrot.slane %v1165, 4
        %v1167 = vmax.f32 %v1165, %v1166
        %v1168 = vrot.slane %v1167, 2
        %v1169 = vmax.f32 %v1167, %v1168
        %v1170 = vrot.slane %v1169, 1
        %v1171 = vmax.f32 %v1169, %v1170
        %v1172 = vsel %vm1066, %v1065, -inf
        %v1173 = vrot.slane %v1172, 4
        %v1174 = vmax.f32 %v1172, %v1173
        %v1175 = vrot.slane %v1174, 2
        %v1176 = vmax.f32 %v1174, %v1175
        %v1177 = vrot.slane %v1176, 1
        %v1178 = vmax.f32 %v1176, %v1177
        %v1179 = vld [vmem:[%s3] sm:$0xff]
        %v1180 = vld [vmem:[%s3 + $0x8] sm:$0xff]
        %v1181 = vld [vmem:[%s3 + $0x10] sm:$0xff]
        %v1182 = vld [vmem:[%s4] sm:$0x1]
        %v1184 = vlaneseq
        %v1185 = vshrl.u32 %v1184, 7
        %v1186 = vsub.s32 0, %v1185
        %v1187 = vrot.slane %v1182, %v1186
        %vm1205 = vcmask 1041409
        %v1206 = vsel %vm1205, %v1080, %v1073
        %vm1207 = vcmask 1042434
        %v1208 = vsel %vm1207, %v1087, %v1206
        %vm1209 = vcmask 1043459
        %v1210 = vsel %vm1209, %v1094, %v1208
        %vm1211 = vcmask 1044484
        %v1212 = vsel %vm1211, %v1101, %v1210
        %vm1213 = vcmask 1045509
        %v1214 = vsel %vm1213, %v1108, %v1212
        %vm1215 = vcmask 1046534
        %v1216 = vsel %vm1215, %v1115, %v1214
        %vm1217 = vcmask 1047559
        %v1218 = vsel %vm1217, %v1122, %v1216
        %v1219 = vsel %vm1205, %v1136, %v1129
        %v1220 = vsel %vm1207, %v1143, %v1219
        %v1221 = vsel %vm1209, %v1150, %v1220
        %v1222 = vsel %vm1211, %v1157, %v1221
        %v1223 = vsel %vm1213, %v1164, %v1222
        %v1224 = vsel %vm1215, %v1171, %v1223
        %v1225 = vsel %vm1217, %v1178, %v1224
        %v1226 = vsel %vm1066, %v1218, 0
        %v1228 = vsel %vm1066, %v1225, 0
        %1230 = vmatprep.subr.mxu0 0.0
        %1231 = vmatpush1.msra.mxu0 0.0
        %1232 = vmatprep.subr.mxu0 0.0
        %1233 = vmatpush1.msra.mxu0 0.0
        %1234 = vmatprep.subr.mxu0 0.0
        %1235 = vmatpush1.msra.mxu0 0.0
        %1236 = vmatprep.subr.mxu0 0.0
        %1237 = vmatpush1.msra.mxu0 0.0
        %1238 = vmatprep.subr.mxu0 0.0
        %1239 = vmatpush1.msra.mxu0 0.0
        %1240 = vmatprep.subr.mxu0 0.0
        %1241 = vmatpush1.msra.mxu0 0.0
        %1242 = vmatprep.subr.mxu0 0.0
        %1243 = vmatpush1.msra.mxu0 0.0
        %1244 = vmatprep.subr.mxu0 0.0
        %1245 = vmatpush1.msra.mxu0 0.0
        %1246 = vmatprep.subr.mxu0 0.0
        %1247 = vmatpush1.msra.mxu0 0.0
        %1248 = vmatprep.subr.mxu0 0.0
        %1249 = vmatpush1.msra.mxu0 0.0
        %1250 = vmatprep.subr.mxu0 0.0
        %1251 = vmatpush1.msra.mxu0 0.0
        %1252 = vmatprep.subr.mxu0 0.0
        %1253 = vmatpush1.msra.mxu0 0.0
        %1254 = vmatprep.subr.mxu0 0.0
        %1255 = vmatpush1.msra.mxu0 0.0
        %1256 = vmatprep.subr.mxu0 0.0
        %1257 = vmatpush1.msra.mxu0 %v1181
        %1258 = vmatprep.subr.mxu0 0.0
        %1259 = vmatpush1.msra.mxu0 %v1180
        %1260 = vmatprep.subr.mxu0 0.0
        %1261 = vmatpush1.msra.mxu0 %v1179
        %1262 = vmatprep.subr.mxu0 0.0
        %1263 = vmatpush2.msra.mxu0 0.0
        %1264 = vmatprep.subr.mxu0 0.0
        %1265 = vmatpush2.msra.mxu0 0.0
        %1266 = vmatprep.subr.mxu0 0.0
        %1267 = vmatpush2.msra.mxu0 0.0
        %1268 = vmatprep.subr.mxu0 0.0
        %1269 = vmatpush2.msra.mxu0 0.0
        %1270 = vmatprep.subr.mxu0 0.0
        %1271 = vmatpush2.msra.mxu0 0.0
        %1272 = vmatprep.subr.mxu0 0.0
        %1273 = vmatpush2.msra.mxu0 0.0
        %1274 = vmatprep.subr.mxu0 0.0
        %1275 = vmatpush2.msra.mxu0 0.0
        %1276 = vmatprep.subr.mxu0 0.0
        %1277 = vmatpush2.msra.mxu0 0.0
        %1278 = vmatprep.subr.mxu0 0.0
        %1279 = vmatpush2.msra.mxu0 0.0
        %1280 = vmatprep.subr.mxu0 0.0
        %1281 = vmatpush2.msra.mxu0 0.0
        %1282 = vmatprep.subr.mxu0 0.0
        %1283 = vmatpush2.msra.mxu0 0.0
        %1284 = vmatprep.subr.mxu0 0.0
        %1285 = vmatpush2.msra.mxu0 0.0
        %1286 = vmatprep.subr.mxu0 0.0
        %1287 = vmatpush2.msra.mxu0 0.0
        %1288 = vmatprep.subr.mxu0 0.0
        %1289 = vmatpush2.msra.mxu0 0.0
        %1290 = vmatprep.subr.mxu0 0.0
        %1291 = vmatpush2.msra.mxu0 0.0
        %1292 = vmatprep.subr.mxu0 0.0
        %1293 = vmatpush2.msra.mxu0 0.0
        %1294 = vmatprep.mubr.f32.mxu0 0.0
        %1295 = vmatmul.mubr.f32.gmra.mxu0 %v1226
        %v1296 = vpop.f32.mrf.mxu0
        %v1297 = vadd.f32 %v1187, %v1296
        %v1298 = vpop.f32.mrf.mxu0
        %1299 = vmatprep.mubr.f32.mxu0 0.0
        %1300 = vmatmul.mubr.f32.gmra.mxu0 %v1228
        %v1301 = vpop.f32.mrf.mxu0
        %v1302 = vadd.f32 %v1187, %v1301
        %v1303 = vpop.f32.mrf.mxu0
        %1304 = vdwg.mxu0
        %1305 = vst [vmem:[%s218] sm:$0xff] %v1297
        %1306 = vst [vmem:[%s218 + $0x8] sm:$0xff] %v1302
        %s1307 = sand.u32 %s137, 1
        %s1308 = scalar_lea.sflag [#allocation3], %s1307
        %s1309 = sand.u32 %s137, 1
        %s1310 = smul.addr %s1309, 16
        %s1311 = scalar_lea.vmem [#allocation2], %s1310
        // Predicated region
        $region41: #{tpu_custom_call.1} parent=39 // pred_check
          %p1312 = pneg %p147
        $region42: #{tpu_custom_call.1} parent=39 // pred_check_branch
          %1314 = sbr.rel (%p1312) target = $region44
        $region43: #{tpu_custom_call.1} parent=39 // pred_region
          %s1315 = smul.u32 2, %s19
          %s1317 = ssub.s32 256, 256
          %1318 = vsyncadd %s1308, %s1317
          %s1319 = smul.addr %s1315, 128
          %s1320 = scalar_lea.hbm %s5, %s1319
          %s1321 = sshll.u32 %s1311, 4
          %s1322 = int_to_ptr.vmem [resolvable:$true] %s1321
          %1327 = dma.vmem_to_hbm [thread:$0]  %s1322, 256, %s1320, %s1308, 128, 128, 8
        $region44: #{tpu_custom_call.1} parent=39 // pred_fallthru
          _
      $region40: #{tpu_custom_call.1} parent=5 // pred_fallthru
        _
      %p1328 = scmp.le.s32.totalorder 2, %s14
      // Predicated region
      $region45: #{tpu_custom_call.1} parent=5 // pred_check
        %p1329 = pneg %p1328
      $region46: #{tpu_custom_call.1} parent=5 // pred_check_branch
        %1331 = sbr.rel (%p1329) target = $region48
      $region47: #{tpu_custom_call.1} parent=5 // pred_region
        %s1332 = ssub.s32 %s14, 2
        // Predicated region
        $region49: #{tpu_custom_call.1} parent=47 // pred_check
          %p1333 = pneg %p153
        $region50: #{tpu_custom_call.1} parent=47 // pred_check_branch
          %1335 = sbr.rel (%p1333) target = $region52
        $region51: #{tpu_custom_call.1} parent=47 // pred_region
          %s1336 = sand.u32 %s138, 1
          %s1337 = scalar_lea.sflag [#allocation3], %s1336
          %s1338 = sand.u32 %s138, 1
          %s1339 = smul.addr %s1338, 16
          %s1340 = scalar_lea.vmem [#allocation2], %s1339
          %1341 = dma.done %s1337, 256
        $region52: #{tpu_custom_call.1} parent=47 // pred_fallthru
          _
      $region48: #{tpu_custom_call.1} parent=5 // pred_fallthru
        _
    $region6: #{tpu_custom_call.1} parent=1 // loop_footer
      %s18 = sadd.s32 1, %s14
    $region7: #{tpu_custom_call.1} parent=1 // loop_footer_branch
      %13 = sbr.rel target = $region3
    $region8: #{tpu_custom_call.1} parent=1 // loop_exit
      _
    %1342 = vsyncpa [#allocation3], 1
    %s1343 = scalar_lea.sflag [#allocation3], 1
    %1344 = vsyncpa %s1343, 1

</llo_original>
